<compile_context>
chip_gen: v7x
topology: tpu7x:2x2x1
jax: 0.10.0
libtpu: 0.0.40
codegen_flags: <defaults>
</compile_context>

<pallas_src>
import functools

import jax
import jax.numpy as jnp
from jax.experimental import pallas as pl
from jax.experimental.pallas import tpu as pltpu

_LANES = 128      # vreg lane width
_SUBLANES = 8     # vreg sublane depth (32-bit dtypes)


def _value_projection_kernel(x_ref, w_ref, b_ref, o_ref):
    """One row-tile: o = x @ W + b  (single MXU matmul, f32 accumulation)."""
    o_ref[...] = (
        jnp.dot(x_ref[...], w_ref[...], preferred_element_type=jnp.float32)
        + b_ref[...]
    ).astype(o_ref.dtype)


@functools.partial(jax.jit, static_argnames=("block_rows",))
def self_attention_block(x, wq, bq, wk, bk, wv, bv, *, block_rows=256):
    """Forward pass of SelfAttentionBlock.

    x:  (B, T, C) float32
    w*: (C, H)    pre-transposed Linear weights (torch weight is (H, C))
    b*: (1, H)

    wq/bq/wk/bk are accepted for API parity with the module's parameters but
    are mathematically dead (softmax row-sums are identically 1, so the
    reference 'btu,btj->btj' einsum returns v); only wv/bv are used.
    """
    del wq, bq, wk, bk  # dead math -- see header comment

    B, T, C = x.shape
    H = wv.shape[1]
    rows = B * T
    x2 = x.reshape(rows, C)

    # Lane-dense output: pad the head dim up to a multiple of 128 lanes.
    h_pad = ((H + _LANES - 1) // _LANES) * _LANES
    w_p = wv
    b_p = jnp.reshape(bv, (1, H))
    if h_pad != H:
        w_p = jnp.zeros((C, h_pad), wv.dtype).at[:, :H].set(wv)
        b_p = jnp.zeros((1, h_pad), bv.dtype).at[:, :H].set(b_p)

    # Sublane-dense row tiles; pad the row count to a multiple of the tile.
    if rows >= block_rows:
        bm = block_rows
    else:
        bm = ((rows + _SUBLANES - 1) // _SUBLANES) * _SUBLANES
    rows_pad = ((rows + bm - 1) // bm) * bm
    x_p = x2
    if rows_pad != rows:
        x_p = jnp.zeros((rows_pad, C), x.dtype).at[:rows].set(x2)

    out = pl.pallas_call(
        _value_projection_kernel,
        out_shape=jax.ShapeDtypeStruct((rows_pad, h_pad), x.dtype),
        grid_spec=pltpu.PrefetchScalarGridSpec(
            num_scalar_prefetch=0,
            grid=(rows_pad // bm,),
            in_specs=[
                pl.BlockSpec((bm, C), lambda i: (i, 0)),      # x row tile
                pl.BlockSpec((C, h_pad), lambda i: (0, 0)),   # Wv (resident)
                pl.BlockSpec((1, h_pad), lambda i: (0, 0)),   # bv (resident)
            ],
            out_specs=pl.BlockSpec((bm, h_pad), lambda i: (i, 0)),
        ),
        compiler_params=pltpu.CompilerParams(
            dimension_semantics=("parallel",)),
    )(x_p, w_p, b_p)

    return out[:rows, :H].reshape(B, T, H)


def _reference(x, wq, bq, wk, bk, wv, bv):
    """Pure-JAX replica of the PyTorch forward (full degenerate attention)."""
    q = x @ wq + bq
    k = x @ wk + bk
    v = x @ wv + bv
    weights = jnp.einsum('bti,bui->btu', q, k)
    T = x.shape[1]
    mask = jnp.triu(jnp.ones((T, T), dtype=bool), k=1)
    weights = jnp.where(mask[None], -jnp.inf, weights)
    weights = jax.nn.softmax(weights, axis=2)
    out = jnp.einsum('btu,btj->btj', weights, v)
    return out


if __name__ == "__main__":
    # Small shapes consistent with the module: n_embed=32, head_size=16, T=8.
    B, T, C, H = 2, 8, 32, 16

    key = jax.random.PRNGKey(0)
    kx, kq, kk, kv, kbq, kbk, kbv = jax.random.split(key, 7)

    x = jax.random.normal(kx, (B, T, C), dtype=jnp.float32)
    # PyTorch Linear(C, H) weight is (H, C); we store the transpose (C, H)
    # so the math is x @ W + b.
    scale = 1.0 / jnp.sqrt(jnp.float32(C))
    wq = jax.random.uniform(kq, (C, H), jnp.float32, -scale, scale)
    wk = jax.random.uniform(kk, (C, H), jnp.float32, -scale, scale)
    wv = jax.random.uniform(kv, (C, H), jnp.float32, -scale, scale)
    bq = jax.random.uniform(kbq, (1, H), jnp.float32, -scale, scale)
    bk = jax.random.uniform(kbk, (1, H), jnp.float32, -scale, scale)
    bv = jax.random.uniform(kbv, (1, H), jnp.float32, -scale, scale)

    out = self_attention_block(x, wq, bq, wk, bk, wv, bv)
    out = jax.block_until_ready(out)

    ref = _reference(x, wq, bq, wk, bk, wv, bv)
    assert out.shape == (B, T, H)
    # Tolerance covers f32 rounding of the (identically-1) softmax row-sums
    # that the kernel folds away, plus MXU-vs-XLA matmul rounding.
    assert jnp.allclose(out, ref, atol=1e-4, rtol=1e-4), "mismatch vs reference"

    print("KERNEL_OK")
</pallas_src>

<mosaic_0001>
module attributes {stable_mosaic.version = 11 : i64} {
  func.func @_value_projection_kernel(%arg0: i32, %arg1: memref<16x32xf32, #tpu.memory_space<vmem>>, %arg2: memref<32x128xf32, #tpu.memory_space<vmem>>, %arg3: memref<1x128xf32, #tpu.memory_space<vmem>>, %arg4: memref<16x128xf32, #tpu.memory_space<vmem>>) attributes {dimension_semantics = [#tpu.dimension_semantics<parallel>], iteration_bounds = array<i64: 1>, scalar_prefetch = 0 : i64, scratch_operands = 0 : i64, tpu.core_type = #tpu.core_type<tc>, window_params = [{transform_indices = @transform_0, window_bounds = array<i64: 16, 32>}, {pipeline_mode = #tpu.pipeline_mode<synchronous>, transform_indices = @transform_1, window_bounds = array<i64: 32, 128>}, {pipeline_mode = #tpu.pipeline_mode<synchronous>, transform_indices = @transform_2, window_bounds = array<i64: 1, 128>}, {transform_indices = @transform_3, window_bounds = array<i64: 16, 128>}]} {
    %c0 = arith.constant 0 : index
    %c0_0 = arith.constant 0 : index
    %0 = vector.load %arg1[%c0, %c0_0] : memref<16x32xf32, #tpu.memory_space<vmem>>, vector<16x32xf32>
    %c0_1 = arith.constant 0 : index
    %c0_2 = arith.constant 0 : index
    %1 = vector.load %arg2[%c0_1, %c0_2] : memref<32x128xf32, #tpu.memory_space<vmem>>, vector<32x128xf32>
    %cst = arith.constant dense<0.000000e+00> : vector<16x128xf32>
    %2 = tpu.matmul %0, %1, %cst {dimension_numbers = #tpu.dot_dimension_numbers<[1], [0], [0], [1], [0, 0, 1, 1], [], []>} : vector<16x32xf32>, vector<32x128xf32>, vector<16x128xf32> -> vector<16x128xf32>
    %c0_3 = arith.constant 0 : index
    %c0_4 = arith.constant 0 : index
    %3 = vector.load %arg3[%c0_3, %c0_4] : memref<1x128xf32, #tpu.memory_space<vmem>>, vector<1x128xf32>
    %4 = vector.broadcast %3 : vector<1x128xf32> to vector<16x128xf32>
    %5 = arith.addf %2, %4 : vector<16x128xf32>
    %c0_5 = arith.constant 0 : index
    %c0_6 = arith.constant 0 : index
    %6 = vector.load %arg4[%c0_5, %c0_6] : memref<16x128xf32, #tpu.memory_space<vmem>>, vector<16x128xf32>
    tpu.vector_store %arg4[%c0_5, %c0_6], %5 {strides = array<i32>} : memref<16x128xf32, #tpu.memory_space<vmem>>, vector<16x128xf32>,
    return
  }
  func.func @transform_0(%arg0: i32) -> (i32, i32) {
    %c0_i32 = arith.constant 0 : i32
    %c0_i32_0 = arith.constant 0 : i32
    return %arg0, %c0_i32 : i32, i32
  }
  func.func @transform_1(%arg0: i32) -> (i32, i32) {
    %c0_i32 = arith.constant 0 : i32
    %c0_i32_0 = arith.constant 0 : i32
    %c0_i32_1 = arith.constant 0 : i32
    return %c0_i32, %c0_i32_0 : i32, i32
  }
  func.func @transform_2(%arg0: i32) -> (i32, i32) {
    %c0_i32 = arith.constant 0 : i32
    %c0_i32_0 = arith.constant 0 : i32
    %c0_i32_1 = arith.constant 0 : i32
    return %c0_i32, %c0_i32_0 : i32, i32
  }
  func.func @transform_3(%arg0: i32) -> (i32, i32) {
    %c0_i32 = arith.constant 0 : i32
    %c0_i32_0 = arith.constant 0 : i32
    return %arg0, %c0_i32 : i32, i32
  }
}

</mosaic_0001>

<llo_original>
// kernel: self_attention_block.1
$region0: #{self_attention_block.1}
  #allocation0 [shape = 'u32[]', space=smem, size = 0x4, offset = 0x4, fixed_abs, tag = 'smem constant byte address 0x4 - core index']
  #allocation1 [shape = 'u32[144,128]{1,0:T(1,128)}', space=vmem, size = 0x12000, scoped, tag = 'internal scratch']
  %s0 = inlined_call_operand.vmem [shape: f32[16,32], index: 0, kind: input, shape index: {}]
  %s1 = inlined_call_operand.vmem [shape: f32[32,128], index: 1, kind: input, shape index: {}]
  %s2 = inlined_call_operand.vmem [shape: f32[1,128], index: 2, kind: input, shape index: {}]
  %s3 = inlined_call_operand.vmem [shape: f32[16,128], index: 3, kind: output, shape index: {}]
  %s4 = sld [smem:[#allocation0]]
  $region22: #{self_attention_block.1} parent=0
    _
  %s6 = ssub.s32 1, %s4
  %s7 = scalar_select 0, %s6, %s4
  // Predicated region
  $region2: #{self_attention_block.1} parent=0 // pred_check
    _
  $region3: #{self_attention_block.1} parent=0 // pred_check_branch
    %9 = sbr.rel (0) target = $region5
  $region4: #{self_attention_block.1} parent=0 // pred_region
    _
  $region5: #{self_attention_block.1} parent=0 // pred_fallthru
    _
  // Predicated region
  $region6: #{self_attention_block.1} parent=0 // pred_check
    _
  $region7: #{self_attention_block.1} parent=0 // pred_check_branch
    %11 = sbr.rel (0) target = $region9
  $region8: #{self_attention_block.1} parent=0 // pred_region
    _
  $region9: #{self_attention_block.1} parent=0 // pred_fallthru
    _
  // Predicated region
  $region10: #{self_attention_block.1} parent=0 // pred_check
    _
  $region11: #{self_attention_block.1} parent=0 // pred_check_branch
    %13 = sbr.rel (0) target = $region13
  $region12: #{self_attention_block.1} parent=0 // pred_region
    _
  $region13: #{self_attention_block.1} parent=0 // pred_fallthru
    _
  %v14 = vld [vmem:[%s0] sm:$0xff]
  %v15 = vld [vmem:[%s0 + $0x8] sm:$0xff]
  %v16 = vld [vmem:[%s1] sm:$0xff]
  %v17 = vld [vmem:[%s1 + $0x8] sm:$0xff]
  %v18 = vld [vmem:[%s1 + $0x10] sm:$0xff]
  %v19 = vld [vmem:[%s1 + $0x18] sm:$0xff]
  %v20 = vld [vmem:[%s2] sm:$0x1]
  %v22 = vlaneseq
  %v23 = vshrl.u32 %v22, 7
  %v24 = vsub.s32 0, %v23
  %v25 = vrot.slane %v20, %v24
  %vm27 = vcmask 261120
  %v29 = vsel %vm27, %v14, 0
  %v32 = vsel %vm27, %v15, 0
  %34 = vmatprep.subr.mxu0 0.0
  %35 = vmatpush1.msra.mxu0 %v16
  %36 = vmatprep.subr.mxu0 0.0
  %37 = vmatpush1.msra.mxu0 %v17
  %38 = vmatprep.subr.mxu0 0.0
  %39 = vmatpush1.msra.mxu0 %v18
  %40 = vmatprep.subr.mxu0 0.0
  %41 = vmatpush1.msra.mxu0 %v19
  %42 = vmatprep.subr.mxu0 0.0
  %43 = vmatpush1.msra.mxu0 0.0
  %44 = vmatprep.subr.mxu0 0.0
  %45 = vmatpush1.msra.mxu0 0.0
  %46 = vmatprep.subr.mxu0 0.0
  %47 = vmatpush1.msra.mxu0 0.0
  %48 = vmatprep.subr.mxu0 0.0
  %49 = vmatpush1.msra.mxu0 0.0
  %50 = vmatprep.subr.mxu0 0.0
  %51 = vmatpush1.msra.mxu0 0.0
  %52 = vmatprep.subr.mxu0 0.0
  %53 = vmatpush1.msra.mxu0 0.0
  %54 = vmatprep.subr.mxu0 0.0
  %55 = vmatpush1.msra.mxu0 0.0
  %56 = vmatprep.subr.mxu0 0.0
  %57 = vmatpush1.msra.mxu0 0.0
  %58 = vmatprep.subr.mxu0 0.0
  %59 = vmatpush1.msra.mxu0 0.0
  %60 = vmatprep.subr.mxu0 0.0
  %61 = vmatpush1.msra.mxu0 0.0
  %62 = vmatprep.subr.mxu0 0.0
  %63 = vmatpush1.msra.mxu0 0.0
  %64 = vmatprep.subr.mxu0 0.0
  %65 = vmatpush1.msra.mxu0 0.0
  %66 = vmatprep.subr.mxu0 0.0
  %67 = vmatpush1.msra.mxu0 0.0
  %68 = vmatprep.subr.mxu0 0.0
  %69 = vmatpush1.msra.mxu0 0.0
  %70 = vmatprep.subr.mxu0 0.0
  %71 = vmatpush1.msra.mxu0 0.0
  %72 = vmatprep.subr.mxu0 0.0
  %73 = vmatpush1.msra.mxu0 0.0
  %74 = vmatprep.subr.mxu0 0.0
  %75 = vmatpush1.msra.mxu0 0.0
  %76 = vmatprep.subr.mxu0 0.0
  %77 = vmatpush1.msra.mxu0 0.0
  %78 = vmatprep.subr.mxu0 0.0
  %79 = vmatpush1.msra.mxu0 0.0
  %80 = vmatprep.subr.mxu0 0.0
  %81 = vmatpush1.msra.mxu0 0.0
  %82 = vmatprep.subr.mxu0 0.0
  %83 = vmatpush1.msra.mxu0 0.0
  %84 = vmatprep.subr.mxu0 0.0
  %85 = vmatpush1.msra.mxu0 0.0
  %86 = vmatprep.subr.mxu0 0.0
  %87 = vmatpush1.msra.mxu0 0.0
  %88 = vmatprep.subr.mxu0 0.0
  %89 = vmatpush1.msra.mxu0 0.0
  %90 = vmatprep.subr.mxu0 0.0
  %91 = vmatpush1.msra.mxu0 0.0
  %92 = vmatprep.subr.mxu0 0.0
  %93 = vmatpush1.msra.mxu0 0.0
  %94 = vmatprep.subr.mxu0 0.0
  %95 = vmatpush1.msra.mxu0 0.0
  %96 = vmatprep.subr.mxu0 0.0
  %97 = vmatpush1.msra.mxu0 0.0
  %98 = vmatprep.mubr.f32.mxu0 0.0
  %99 = vmatmul.mubr.f32.gmra.mrb[0].mxu0 %v29
  %v100 = vpop.f32.mrb[0].mxu0
  %v101 = vadd.f32 %v25, %v100
  %v102 = vpop.f32.mrb[0].mxu0
  %103 = vmatprep.mubr.f32.mxu0 0.0
  %104 = vmatmul.mubr.f32.gmra.mrb[0].mxu0 %v32
  %v105 = vpop.f32.mrb[0].mxu0
  %v106 = vadd.f32 %v25, %v105
  %v107 = vpop.f32.mrb[0].mxu0
  %108 = vdwg.mxu0
  %109 = vst [vmem:[%s3] sm:$0xff] %v101
  %110 = vst [vmem:[%s3 + $0x8] sm:$0xff] %v106
  // Predicated region
  $region14: #{self_attention_block.1} parent=0 // pred_check
    _
  $region15: #{self_attention_block.1} parent=0 // pred_check_branch
    %112 = sbr.rel (0) target = $region17
  $region16: #{self_attention_block.1} parent=0 // pred_region
    _
  $region17: #{self_attention_block.1} parent=0 // pred_fallthru
    _
  // Predicated region
  $region18: #{self_attention_block.1} parent=0 // pred_check
    _
  $region19: #{self_attention_block.1} parent=0 // pred_check_branch
    %114 = sbr.rel (0) target = $region21
  $region20: #{self_attention_block.1} parent=0 // pred_region
    _
  $region21: #{self_attention_block.1} parent=0 // pred_fallthru
    _

</llo_original>
